<compile_context>
chip_gen: v6e
topology: v6e:2x2x1
jax: 0.10.0
libtpu: 0.0.40
codegen_flags: <defaults>
</compile_context>

<pallas_src>
import jax
import jax.numpy as jnp
from jax.experimental import pallas as pl
from jax.experimental.pallas import tpu as pltpu

# ---- erf constants (A&S 7.1.26) with GELU constants folded in at trace time ----------
_INV_SQRT2 = 0.7071067811865476
_AS_P = 0.3275911
_PC = _AS_P * _INV_SQRT2          # t = 1 / (1 + _PC * |x|)   (the 1/sqrt(2) folded in)
# 0.5 * a_k : the 0.5 of  gelu = x*0.5*(1+erf)  folded into the polynomial coefficients.
_HA1 = 0.5 * 0.254829592
_HA2 = 0.5 * -0.284496736
_HA3 = 0.5 * 1.421413741
_HA4 = 0.5 * -1.453152027
_HA5 = 0.5 * 1.061405429


def _gelu_kernel(x_ref, o_ref):
    x = x_ref[...].astype(jnp.float32)
    a = jnp.abs(x)

    # t = 1 / (1 + p*|x|/sqrt(2)) : approx reciprocal on the EUP + one Newton refinement.
    d = 1.0 + _PC * a
    t = pl.reciprocal(d, approx=True)
    t = t * (2.0 - d * t)

    # 0.5 * P(t) (Horner, coefficients pre-halved).
    p = _HA5
    p = p * t + _HA4
    p = p * t + _HA3
    p = p * t + _HA2
    p = p * t + _HA1
    p = p * t

    e = jnp.exp(-0.5 * (x * x))        # EUP
    half_one_minus_erf = p * e         # = 0.5 * (1 - erf(|x|/sqrt(2)))

    # gelu(x) = x*0.5*(1 + erf(x/sqrt(2))) = 0.5*(x + |x|) - |x| * 0.5*(1 - erf(|x|/sqrt(2)))
    y = 0.5 * (x + a) - a * half_one_minus_erf
    o_ref[...] = y.astype(o_ref.dtype)


def _round_up(v: int, m: int) -> int:
    return (v + m - 1) // m * m


def gelu_pallas(x: jax.Array) -> jax.Array:
    """Elementwise exact GELU on an arbitrary-shaped array via a Pallas TPU kernel."""
    orig_shape = x.shape
    orig_dtype = x.dtype

    n = x.size
    LANES = 128
    SUBLANES = 8
    MAX_TILE_ROWS = 4096       # 2 MiB f32 block; 8 MiB live (2x in + 2x out) fits all gens
    MIN_TILE_ROWS = 256        # 128 KiB f32 block floor for split tiles
    SINGLE_BLOCK_ROWS = 256    # at/below this, a single block beats pipeline overhead

    # --- Present a lane-dense 2D slab (rows, 128). Avoid HBM copies when possible. ---
    if n % LANES == 0:
        rows = n // LANES
        x2d = jnp.reshape(x, (rows, LANES))
        pad = 0
    else:
        # Rare path (NCHW activations almost always have size % 128 == 0).
        pad = (-n) % (LANES * SUBLANES)
        x_flat = jnp.reshape(x, (-1,))
        x_flat = jnp.concatenate([x_flat, jnp.zeros((pad,), dtype=orig_dtype)])
        rows = x_flat.size // LANES
        x2d = jnp.reshape(x_flat, (rows, LANES))

    # --- Tile / grid selection ---------------------------------------------------------
    if rows <= SINGLE_BLOCK_ROWS:
        # Tiny tensor: one block equal to the full array (divisibility constraint waived).
        tile_rows, grid_n = rows, 1
    else:
        # Target an even step count >= 8: overlapped DMA/compute and an even split of the
        # "parallel" axis across v7x's two TensorCores. Blocks capped at 2 MiB, floored at
        # 128 KiB; partial last block is masked by Pallas on write-back.
        steps = max(8, _round_up(pl.cdiv(rows, MAX_TILE_ROWS), 2))
        tile_rows = min(MAX_TILE_ROWS,
                        max(MIN_TILE_ROWS, _round_up(pl.cdiv(rows, steps), 8)))
        grid_n = pl.cdiv(rows, tile_rows)

    out2d = pl.pallas_call(
        _gelu_kernel,
        out_shape=jax.ShapeDtypeStruct((rows, LANES), orig_dtype),
        grid=(grid_n,),
        in_specs=[pl.BlockSpec((tile_rows, LANES), lambda i: (i, 0))],
        out_specs=pl.BlockSpec((tile_rows, LANES), lambda i: (i, 0)),
        input_output_aliases={0: 0},   # reuse input HBM buffer if the caller donates it
        compiler_params=pltpu.CompilerParams(
            dimension_semantics=("parallel",),  # shards grid across TCs on v7x
        ),
    )(x2d)

    if pad:
        out_flat = jnp.reshape(out2d, (-1,))[:n]
        return jnp.reshape(out_flat, orig_shape)
    return jnp.reshape(out2d, orig_shape)


if __name__ == "__main__":
    key = jax.random.PRNGKey(0)

    # NCHW input, small shape consistent with the eltwise-unary test module.
    x = jax.random.normal(key, (2, 4, 16, 16), dtype=jnp.float32)
    y = jax.block_until_ready(gelu_pallas(x))
    ref = jax.nn.gelu(x, approximate=False)
    assert y.shape == x.shape and y.dtype == x.dtype
    assert jnp.max(jnp.abs(y - ref)) < 1e-5

    k1, k2 = jax.random.split(key)

    # Multi-block pipelined path (3200 rows -> 8 grid steps).
    x_big = jax.random.normal(k1, (2, 4, 400, 128), dtype=jnp.float32)
    y_big = jax.block_until_ready(gelu_pallas(x_big))
    assert jnp.max(jnp.abs(y_big - jax.nn.gelu(x_big, approximate=False))) < 1e-5

    # Parity of the hand-rolled erf over a wide input range vs exact GELU.
    x_wide = jnp.linspace(-10.0, 10.0, 1024 * 128, dtype=jnp.float32).reshape(1024, 128)
    y_wide = jax.block_until_ready(gelu_pallas(x_wide))
    assert jnp.max(jnp.abs(y_wide - jax.nn.gelu(x_wide, approximate=False))) < 1e-5

    # Rare pad path (size % 128 != 0).
    x_odd = jax.random.normal(k2, (3, 5, 7, 11), dtype=jnp.float32)
    y_odd = jax.block_until_ready(gelu_pallas(x_odd))
    assert jnp.max(jnp.abs(y_odd - jax.nn.gelu(x_odd, approximate=False))) < 1e-5

    print("KERNEL_OK")
</pallas_src>

<mosaic_0001>
module attributes {stable_mosaic.version = 11 : i64} {
  func.func @_gelu_kernel(%arg0: i32, %arg1: memref<16x128xf32, #tpu.memory_space<vmem>>, %arg2: memref<16x128xf32, #tpu.memory_space<vmem>>) attributes {dimension_semantics = [#tpu.dimension_semantics<parallel>], iteration_bounds = array<i64: 1>, scalar_prefetch = 0 : i64, scratch_operands = 0 : i64, tpu.core_type = #tpu.core_type<tc>, window_params = [{transform_indices = @transform_0, window_bounds = array<i64: 16, 128>}, {transform_indices = @transform_1, window_bounds = array<i64: 16, 128>}]} {
    %c0 = arith.constant 0 : index
    %c0_0 = arith.constant 0 : index
    %0 = vector.load %arg1[%c0, %c0_0] : memref<16x128xf32, #tpu.memory_space<vmem>>, vector<16x128xf32>
    %1 = math.absf %0 : vector<16x128xf32>
    %cst = arith.constant 0.231641889 : f32
    %2 = vector.broadcast %cst : f32 to vector<16x128xf32>
    %3 = arith.mulf %2, %1 : vector<16x128xf32>
    %cst_1 = arith.constant 1.000000e+00 : f32
    %4 = vector.broadcast %cst_1 : f32 to vector<16x128xf32>
    %5 = arith.addf %4, %3 : vector<16x128xf32>
    %6 = tpu.reciprocal %5 {approx = true} : vector<16x128xf32> -> vector<16x128xf32>
    %7 = arith.mulf %5, %6 : vector<16x128xf32>
    %cst_2 = arith.constant 2.000000e+00 : f32
    %8 = vector.broadcast %cst_2 : f32 to vector<16x128xf32>
    %9 = arith.subf %8, %7 : vector<16x128xf32>
    %10 = arith.mulf %6, %9 : vector<16x128xf32>
    %cst_3 = arith.constant 0.53070271 : f32
    %11 = vector.broadcast %cst_3 : f32 to vector<16x128xf32>
    %12 = arith.mulf %11, %10 : vector<16x128xf32>
    %cst_4 = arith.constant -0.72657603 : f32
    %13 = vector.broadcast %cst_4 : f32 to vector<16x128xf32>
    %14 = arith.addf %12, %13 : vector<16x128xf32>
    %15 = arith.mulf %14, %10 : vector<16x128xf32>
    %cst_5 = arith.constant 0.710706889 : f32
    %16 = vector.broadcast %cst_5 : f32 to vector<16x128xf32>
    %17 = arith.addf %15, %16 : vector<16x128xf32>
    %18 = arith.mulf %17, %10 : vector<16x128xf32>
    %cst_6 = arith.constant -0.142248362 : f32
    %19 = vector.broadcast %cst_6 : f32 to vector<16x128xf32>
    %20 = arith.addf %18, %19 : vector<16x128xf32>
    %21 = arith.mulf %20, %10 : vector<16x128xf32>
    %cst_7 = arith.constant 0.127414793 : f32
    %22 = vector.broadcast %cst_7 : f32 to vector<16x128xf32>
    %23 = arith.addf %21, %22 : vector<16x128xf32>
    %24 = arith.mulf %23, %10 : vector<16x128xf32>
    %25 = arith.mulf %0, %0 : vector<16x128xf32>
    %cst_8 = arith.constant -5.000000e-01 : f32
    %26 = vector.broadcast %cst_8 : f32 to vector<16x128xf32>
    %27 = arith.mulf %26, %25 : vector<16x128xf32>
    %28 = math.exp %27 : vector<16x128xf32>
    %29 = arith.mulf %24, %28 : vector<16x128xf32>
    %30 = arith.addf %0, %1 : vector<16x128xf32>
    %cst_9 = arith.constant 5.000000e-01 : f32
    %31 = vector.broadcast %cst_9 : f32 to vector<16x128xf32>
    %32 = arith.mulf %31, %30 : vector<16x128xf32>
    %33 = arith.mulf %1, %29 : vector<16x128xf32>
    %34 = arith.subf %32, %33 : vector<16x128xf32>
    %c0_10 = arith.constant 0 : index
    %c0_11 = arith.constant 0 : index
    %35 = vector.load %arg2[%c0_10, %c0_11] : memref<16x128xf32, #tpu.memory_space<vmem>>, vector<16x128xf32>
    tpu.vector_store %arg2[%c0_10, %c0_11], %34 {strides = array<i32>} : memref<16x128xf32, #tpu.memory_space<vmem>>, vector<16x128xf32>,
    return
  }
  func.func @transform_0(%arg0: i32) -> (i32, i32) {
    %c0_i32 = arith.constant 0 : i32
    %c0_i32_0 = arith.constant 0 : i32
    return %arg0, %c0_i32 : i32, i32
  }
  func.func @transform_1(%arg0: i32) -> (i32, i32) {
    %c0_i32 = arith.constant 0 : i32
    %c0_i32_0 = arith.constant 0 : i32
    return %arg0, %c0_i32 : i32, i32
  }
}

</mosaic_0001>

<llo_original>
// kernel: tpu_custom_call.1
$region0: #{tpu_custom_call.1}
  #allocation0 [shape = 'u32[]', space=smem, size = 0x4, offset = 0x4, fixed_abs, tag = 'smem constant byte address 0x4 - core index']
  #allocation1 [shape = 'u32[144,128]{1,0:T(1,128)}', space=vmem, size = 0x12000, scoped, tag = 'internal scratch']
  %s0 = inlined_call_operand.hbm [shape: f32[16,128], index: 0, kind: input, shape index: {}, may-alias: {0,1}]
  %s1 = inlined_call_operand.hbm [shape: f32[16,128], index: 1, kind: output, shape index: {}, may-alias: {0,1}]
  %s2 = sld [smem:[#allocation0]]
  $region18: #{tpu_custom_call.1} parent=0
    _
  %s4 = ssub.s32 1, %s2
  %s5 = scalar_select 0, %s4, %s2
  $region1: #{tpu_custom_call.1} parent=0
    #allocation2 [shape = 'u8[8192]{0}', space=vmem, size = 0x2000, scoped, tag = 'input window, operand 0, single buffered']
    #allocation3 [shape = 's32[1]{0}', space=sflag, size = 0x4, scoped, tag = 'scoped memory for tpu_custom_call.1']
    #allocation4 [shape = 's32[1]{0}', space=sflag, size = 0x4, scoped, tag = 'scoped memory for tpu_custom_call.1']
    #allocation5 [shape = 'u8[8192]{0}', space=vmem, size = 0x2000, scoped, tag = 'output window, operand 0, single buffered']
    %6 = vsyncpa [#allocation3], 0
    %7 = vsyncpa [#allocation4], 0
    // Predicated region
    $region2: #{tpu_custom_call.1} parent=1 // pred_check
      _
    $region3: #{tpu_custom_call.1} parent=1 // pred_check_branch
      %9 = sbr.rel (0) target = $region5
    $region4: #{tpu_custom_call.1} parent=1 // pred_region
      %s11 = ssub.s32 256, 256
      %12 = vsyncadd [#allocation3], %s11
      %s13 = sshll.u32 [#allocation2], 4
      %s14 = int_to_ptr.vmem [resolvable:$true] %s13
      %19 = dma.hbm_to_vmem [thread:$0]  %s0, 256, %s14, [#allocation3], 128, 128, 8
    $region5: #{tpu_custom_call.1} parent=1 // pred_fallthru
      _
    // Predicated region
    $region6: #{tpu_custom_call.1} parent=1 // pred_check
      _
    $region7: #{tpu_custom_call.1} parent=1 // pred_check_branch
      %21 = sbr.rel (0) target = $region9
    $region8: #{tpu_custom_call.1} parent=1 // pred_region
      %22 = dma.done [#allocation3], 256
    $region9: #{tpu_custom_call.1} parent=1 // pred_fallthru
      _
    %v23 = vld [vmem:[#allocation2] sm:$0xff]
    %v24 = vld [vmem:[#allocation2 + $0x8] sm:$0xff]
    %v25 = vand.u32 2147483647, %v23
    %v26 = vand.u32 2147483647, %v24
    %v27 = vmul.f32 %v25, 0.23164189
    %v28 = vmul.f32 %v26, 0.23164189
    %v29 = vadd.f32 %v27, 1.0
    %v30 = vadd.f32 %v28, 1.0
    %v31 = vrcp.pop %v29
    %v32 = vrcp.pop %v30
    %v33 = vmul.f32 %v29, %v31
    %v34 = vmul.f32 %v30, %v32
    %v35 = vsub.f32 2.0, %v33
    %v36 = vsub.f32 2.0, %v34
    %v37 = vmul.f32 %v31, %v35
    %v38 = vmul.f32 %v32, %v36
    %v39 = vmul.f32 %v37, 0.5307027
    %v40 = vmul.f32 %v38, 0.5307027
    %v41 = vadd.f32 %v39, -0.72657603
    %v42 = vadd.f32 %v40, -0.72657603
    %v43 = vmul.f32 %v41, %v37
    %v44 = vmul.f32 %v42, %v38
    %v45 = vadd.f32 %v43, 0.7107069
    %v46 = vadd.f32 %v44, 0.7107069
    %v47 = vmul.f32 %v45, %v37
    %v48 = vmul.f32 %v46, %v38
    %v49 = vadd.f32 %v47, -0.14224836
    %v50 = vadd.f32 %v48, -0.14224836
    %v51 = vmul.f32 %v49, %v37
    %v52 = vmul.f32 %v50, %v38
    %v53 = vadd.f32 %v51, 0.1274148
    %v54 = vadd.f32 %v52, 0.1274148
    %v55 = vmul.f32 %v53, %v37
    %v56 = vmul.f32 %v54, %v38
    %v57 = vmul.f32 %v23, %v23
    %v58 = vmul.f32 %v24, %v24
    %v59 = vmul.f32 %v57, -0.5
    %v60 = vmul.f32 %v58, -0.5
    %v61 = vmul.f32 %v59, 1.442695
    %v62 = vpow.pop %v61
    %v63 = vmul.f32 %v60, 1.442695
    %v64 = vpow.pop %v63
    %v65 = vmul.f32 %v55, %v62
    %v66 = vmul.f32 %v56, %v64
    %v67 = vadd.f32 %v23, %v25
    %v68 = vadd.f32 %v24, %v26
    %v69 = vmul.f32 %v67, 0.5
    %v70 = vmul.f32 %v68, 0.5
    %v71 = vmul.f32 %v25, %v65
    %v72 = vmul.f32 %v26, %v66
    %v73 = vsub.f32 %v69, %v71
    %v74 = vsub.f32 %v70, %v72
    %75 = vst [vmem:[#allocation5] sm:$0xff] %v73
    %76 = vst [vmem:[#allocation5 + $0x8] sm:$0xff] %v74
    // Predicated region
    $region10: #{tpu_custom_call.1} parent=1 // pred_check
      _
    $region11: #{tpu_custom_call.1} parent=1 // pred_check_branch
      %78 = sbr.rel (0) target = $region13
    $region12: #{tpu_custom_call.1} parent=1 // pred_region
      %s80 = ssub.s32 256, 256
      %81 = vsyncadd [#allocation4], %s80
      %s82 = sshll.u32 [#allocation5], 4
      %s83 = int_to_ptr.vmem [resolvable:$true] %s82
      %88 = dma.vmem_to_hbm [thread:$0]  %s83, 256, %s1, [#allocation4], 128, 128, 8
    $region13: #{tpu_custom_call.1} parent=1 // pred_fallthru
      _
    // Predicated region
    $region14: #{tpu_custom_call.1} parent=1 // pred_check
      _
    $region15: #{tpu_custom_call.1} parent=1 // pred_check_branch
      %90 = sbr.rel (0) target = $region17
    $region16: #{tpu_custom_call.1} parent=1 // pred_region
      %91 = dma.done [#allocation4], 256
    $region17: #{tpu_custom_call.1} parent=1 // pred_fallthru
      _
    %92 = vsyncpa [#allocation3], 1
    %93 = vsyncpa [#allocation4], 1

</llo_original>
